<compile_context>
chip_gen: v7x
topology: tpu7x:2x2x1
jax: 0.10.0
libtpu: 0.0.40
codegen_flags: <defaults>
</compile_context>

<pallas_src>
import functools

import jax
import jax.numpy as jnp
from jax.experimental import pallas as pl
from jax.experimental.pallas import tpu as pltpu


def _poly_kernel(w_ref, x_ref, o_ref, *, dim):
    """o = sum_i w[i] * x**i via a fully-unrolled Horner chain.

    w_ref: SMEM ref (scalar prefetch), shape (dim,), float32
    x_ref: VMEM tile, shape (tm, cols), float32 or bfloat16
    o_ref: VMEM tile, shape (tm, cols), float32
    """
    x = x_ref[...].astype(jnp.float32)
    acc = jnp.full(x.shape, w_ref[dim - 1], dtype=jnp.float32)
    # Fully unrolled (dim is a trace-time constant): keeps the whole chain
    # visible to the scheduler and the carry in vregs (no VMEM round-trips).
    for i in range(dim - 2, -1, -1):
        acc = acc * x + w_ref[i]
    o_ref[...] = acc


def _poly_host(w, x):
    """Plain-jnp Horner fallback for tiny inputs (kernel overhead dominates)."""
    x = x.astype(jnp.float32)
    acc = jnp.full(x.shape, w[-1], dtype=jnp.float32)
    for i in range(int(w.shape[0]) - 2, -1, -1):
        acc = acc * x + w[i]
    return acc


def polynomial_forward(w, x, *, block_rows=2048, lanes=512,
                       small_n_threshold=65536):
    """Pallas equivalent of PolynomialModel.forward.

    w: (dim,) polynomial coefficients (w[i] multiplies x**i)
    x: (N,)  sample points
    returns: (N,) float32
    """
    dim = int(w.shape[0])
    assert dim >= 1, "PolynomialModel requires dim >= 1"
    n = int(x.shape[0])
    w = w.astype(jnp.float32)

    if n == 0:
        return jnp.zeros((0,), jnp.float32)
    if n < small_n_threshold:
        # Small-N fallback: skip pallas_call entirely.
        return _poly_host(w, x)

    # Keep bf16 inputs bf16 through the DMA (halves input HBM traffic);
    # everything else streams as f32.  Upcast happens inside the kernel.
    if x.dtype not in (jnp.float32, jnp.bfloat16):
        x = x.astype(jnp.float32)

    # ---- lane-dense 2-D view: (rows, lanes), pad only the last partial row ----
    cols = lanes                                  # multiple of 128 -> unmasked vst
    rows = pl.cdiv(n, cols)
    n_pad = rows * cols
    aligned = (n_pad == n)
    if not aligned:
        x = jnp.pad(x, (0, n_pad - n))            # only the tail of the last row
    x2 = x.reshape(rows, cols)

    # ---- block rows: multiple of 16 (bf16 sublane packing), >= 4 grid steps,
    #      even step count (v7x megacore split), capped by the VMEM budget ----
    min_steps = 4
    tm = max(16, 16 * pl.cdiv(rows, 16 * min_steps))
    tm = min(tm, block_rows)
    grid = pl.cdiv(rows, tm)                      # partial last block handled by Pallas
    if grid > 1 and grid % 2 == 1:                # make the split even across 2 TCs
        tm = max(16, 16 * pl.cdiv(rows, 16 * (grid + 1)))
        grid = pl.cdiv(rows, tm)

    kernel = functools.partial(_poly_kernel, dim=dim)

    out2 = pl.pallas_call(
        kernel,
        out_shape=jax.ShapeDtypeStruct((rows, cols), jnp.float32),
        grid_spec=pltpu.PrefetchScalarGridSpec(
            num_scalar_prefetch=1,                # w -> SMEM, cheap scalar reads
            grid=(grid,),
            in_specs=[
                pl.BlockSpec((tm, cols), lambda i, w_ref: (i, 0)),   # x tile
            ],
            out_specs=pl.BlockSpec((tm, cols), lambda i, w_ref: (i, 0)),
        ),
        compiler_params=pltpu.CompilerParams(
            dimension_semantics=("parallel",),    # shard rows across TCs (v7x)
            vmem_limit_bytes=32 << 20,            # 2048x512 f32 tiles safe on v5e too
        ),
    )(w, x2)

    out = out2.reshape(-1)
    return out if aligned else out[:n]


def _poly_reference(w, x):
    """Independent power-sum reference (mirrors the PyTorch forward)."""
    x = x.astype(jnp.float32)
    powers = jnp.stack([x ** i for i in range(int(w.shape[0]))], axis=0)
    return w.astype(jnp.float32) @ powers


if __name__ == "__main__":
    key = jax.random.PRNGKey(0)
    k_w, k_x = jax.random.split(key)

    dim = 4   # polynomial degree + 1 (matches nn.Parameter(torch.rand(dim)))
    n = 8     # batch of sample points (x.shape[0] in the PyTorch forward)

    # Deterministic parameter init mimicking torch.rand(dim) (uniform [0, 1)).
    w = jax.random.uniform(k_w, (dim,), dtype=jnp.float32)
    x = jax.random.uniform(k_x, (n,), dtype=jnp.float32, minval=-1.0, maxval=1.0)

    # 1) Module-sized input (n=8): goes through the small-N fallback.
    out = jax.block_until_ready(polynomial_forward(w, x))
    assert out.shape == (n,)
    assert jnp.allclose(out, _poly_reference(w, x), atol=1e-6, rtol=1e-6)

    # 2) Exercise the Pallas kernel path: aligned (free reshape, no pad/slice)
    #    and unaligned (partial final grid block + minimal tail pad).
    for n_big in (262144, 200001):
        x_big = jax.random.uniform(jax.random.fold_in(k_x, n_big), (n_big,),
                                   dtype=jnp.float32, minval=-1.0, maxval=1.0)
        out_big = jax.block_until_ready(polynomial_forward(w, x_big))
        assert out_big.shape == (n_big,)
        assert jnp.allclose(out_big, _poly_reference(w, x_big),
                            atol=1e-5, rtol=1e-5)

    # 3) bf16 input stays bf16 through the DMA and is upcast in-kernel.
    x_bf = jax.random.uniform(jax.random.fold_in(k_x, 7), (262144,),
                              dtype=jnp.float32, minval=-1.0, maxval=1.0
                              ).astype(jnp.bfloat16)
    out_bf = jax.block_until_ready(polynomial_forward(w, x_bf))
    assert jnp.allclose(out_bf, _poly_reference(w, x_bf.astype(jnp.float32)),
                        atol=1e-5, rtol=1e-5)

    print("KERNEL_OK")
</pallas_src>

<mosaic_0001>
module attributes {stable_mosaic.version = 11 : i64} {
  func.func @_poly_kernel(%arg0: i32, %arg1: memref<4xf32, #tpu.memory_space<smem>>, %arg2: memref<128x512xf32, #tpu.memory_space<vmem>>, %arg3: memref<128x512xf32, #tpu.memory_space<vmem>>) attributes {dimension_semantics = [#tpu.dimension_semantics<parallel>], iteration_bounds = array<i64: 4>, scalar_prefetch = 1 : i64, scratch_operands = 0 : i64, tpu.core_type = #tpu.core_type<tc>, window_params = [{transform_indices = @transform_0, window_bounds = array<i64: 128, 512>}, {transform_indices = @transform_1, window_bounds = array<i64: 128, 512>}]} {
    %c0 = arith.constant 0 : index
    %c0_0 = arith.constant 0 : index
    %0 = vector.load %arg2[%c0, %c0_0] : memref<128x512xf32, #tpu.memory_space<vmem>>, vector<128x512xf32>
    %c3 = arith.constant 3 : index
    %1 = memref.load %arg1[%c3] : memref<4xf32, #tpu.memory_space<smem>>
    %2 = vector.broadcast %1 : f32 to vector<128x512xf32>
    %3 = arith.mulf %2, %0 : vector<128x512xf32>
    %c2 = arith.constant 2 : index
    %4 = memref.load %arg1[%c2] : memref<4xf32, #tpu.memory_space<smem>>
    %5 = vector.broadcast %4 : f32 to vector<128x512xf32>
    %6 = arith.addf %3, %5 : vector<128x512xf32>
    %7 = arith.mulf %6, %0 : vector<128x512xf32>
    %c1 = arith.constant 1 : index
    %8 = memref.load %arg1[%c1] : memref<4xf32, #tpu.memory_space<smem>>
    %9 = vector.broadcast %8 : f32 to vector<128x512xf32>
    %10 = arith.addf %7, %9 : vector<128x512xf32>
    %11 = arith.mulf %10, %0 : vector<128x512xf32>
    %c0_1 = arith.constant 0 : index
    %12 = memref.load %arg1[%c0_1] : memref<4xf32, #tpu.memory_space<smem>>
    %13 = vector.broadcast %12 : f32 to vector<128x512xf32>
    %14 = arith.addf %11, %13 : vector<128x512xf32>
    %c0_2 = arith.constant 0 : index
    %c0_3 = arith.constant 0 : index
    %15 = vector.load %arg3[%c0_2, %c0_3] : memref<128x512xf32, #tpu.memory_space<vmem>>, vector<128x512xf32>
    tpu.vector_store %arg3[%c0_2, %c0_3], %14 {strides = array<i32>} : memref<128x512xf32, #tpu.memory_space<vmem>>, vector<128x512xf32>,
    return
  }
  func.func @transform_0(%arg0: i32, %arg1: memref<4xf32, #tpu.memory_space<smem>>) -> (i32, i32) {
    %c0_i32 = arith.constant 0 : i32
    %c0_i32_0 = arith.constant 0 : i32
    return %arg0, %c0_i32 : i32, i32
  }
  func.func @transform_1(%arg0: i32, %arg1: memref<4xf32, #tpu.memory_space<smem>>) -> (i32, i32) {
    %c0_i32 = arith.constant 0 : i32
    %c0_i32_0 = arith.constant 0 : i32
    return %arg0, %c0_i32 : i32, i32
  }
}

</mosaic_0001>

<llo_original>
// kernel: tpu_custom_call.1
$region0: #{tpu_custom_call.1}
  #allocation0 [shape = 'u32[]', space=smem, size = 0x4, offset = 0x4, fixed_abs, tag = 'smem constant byte address 0x4 - core index']
  #allocation1 [shape = 'u32[144,128]{1,0:T(1,128)}', space=vmem, size = 0x12000, scoped, tag = 'internal scratch']
  #allocation2 [shape = 's32[1]{0}', space=sflag, size = 0x4, scoped, tag = 'scoped memory for tpu_custom_call.1']
  #allocation3 [shape = 'u8[512]{0}', space=smem, size = 0x200, scoped, tag = 'prefetched SMEM operand 0']
  %s0 = inlined_call_operand.hbm [shape: f32[4], index: 0, kind: input, shape index: {}]
  %s1 = inlined_call_operand.hbm [shape: f32[512,512], index: 1, kind: input, shape index: {}]
  %s2 = inlined_call_operand.hbm [shape: f32[512,512], index: 2, kind: output, shape index: {}]
  %s3 = sld [smem:[#allocation0]]
  $region41: #{tpu_custom_call.1} parent=0
    _
  %s5 = ssub.s32 1, %s3
  %s6 = scalar_select 0, %s5, %s3
  %8 = dma.hbm_to_smem %s0, 16, [#allocation3], [#allocation2]
  %9 = dma.done [#allocation2], 16
  %10 = sfence
  $region1: #{tpu_custom_call.1} parent=0
    #allocation4 [shape = 'u8[524288]{0}', space=vmem, size = 0x80000, scoped, tag = 'input window, operand 1']
    #allocation5 [shape = 's32[2]{0}', space=sflag, size = 0x8, scoped, tag = 'scoped memory for tpu_custom_call.1']
    #allocation6 [shape = 's32[2]{0}', space=sflag, size = 0x8, scoped, tag = 'scoped memory for tpu_custom_call.1']
    #allocation7 [shape = 'u8[524288]{0}', space=vmem, size = 0x80000, scoped, tag = 'output window, operand 0']
    %11 = vsyncpa [#allocation5], 0
    %s12 = scalar_lea.sflag [#allocation5], 1
    %13 = vsyncpa %s12, 0
    %14 = vsyncpa [#allocation6], 0
    %s15 = scalar_lea.sflag [#allocation6], 1
    %16 = vsyncpa %s15, 0
    loop: start=0, step=1, limit=6
    $region2: #{tpu_custom_call.1} parent=1 // loop_pre_header
      _
    $region3: #{tpu_custom_call.1} parent=1 // loop_header
      %s18 = sphi 0, %s22
      %p19 = scmp.ge.s32.totalorder %s18, 6
      %s28 = sphi 0, %s30
      %s31 = sphi 0, %s28
      %s32 = sphi 0, %s31
      %s48 = sphi 0, %s32
      %s54 = sphi 0, %s56
      %s57 = sphi 0, %s54
      %s58 = sphi 0, %s57
      %s74 = sphi 0, %s58
    $region4: #{tpu_custom_call.1} parent=1 // loop_header_branch
      %21 = sbr.rel (%p19) target = $region8
    $region5: #{tpu_custom_call.1} parent=1 // loop_body
      %s23 = ssub.s32 %s18, 1
      %s24 = ssub.s32 %s18, 2
      %s25 = sadd.s32 %s18, 1
      %s26 = ssub.s32 %s18, %s25
      %p27 = scmp.eq.s32.totalorder %s26, 0
      %s29 = sadd.s32 %s28, 1
      %s30 = scalar_select %p27, %s28, %s29
      %p33 = pneg %p27
      %p34 = scmp.eq.s32.totalorder %s18, 3
      %p35 = por %p33, %p34
      %p36 = scmp.ne.s32.totalorder %s28, %s31
      %p37 = scmp.eq.s32.totalorder %s18, 0
      %p38 = por %p36, %p37
      %p39 = scmp.ne.s32.totalorder %s28, %s31
      %p40 = scmp.eq.s32.totalorder %s23, 3
      %p41 = por %p39, %p40
      %p42 = scmp.ne.s32.totalorder %s31, %s32
      %p43 = scmp.eq.s32.totalorder %s23, 0
      %p44 = por %p42, %p43
      %p45 = scmp.ne.s32.totalorder %s31, %s32
      %p46 = scmp.eq.s32.totalorder %s24, 3
      %p47 = por %p45, %p46
      %p49 = scmp.ne.s32.totalorder %s32, %s48
      %p50 = scmp.eq.s32.totalorder %s24, 0
      %p51 = por %p49, %p50
      %s52 = ssub.s32 %s18, %s25
      %p53 = scmp.eq.s32.totalorder %s52, 0
      %s55 = sadd.s32 %s54, 1
      %s56 = scalar_select %p53, %s54, %s55
      %p59 = pneg %p53
      %p60 = scmp.eq.s32.totalorder %s18, 3
      %p61 = por %p59, %p60
      %p62 = scmp.ne.s32.totalorder %s54, %s57
      %p63 = scmp.eq.s32.totalorder %s18, 0
      %p64 = por %p62, %p63
      %p65 = scmp.ne.s32.totalorder %s54, %s57
      %p66 = scmp.eq.s32.totalorder %s23, 3
      %p67 = por %p65, %p66
      %p68 = scmp.ne.s32.totalorder %s57, %s58
      %p69 = scmp.eq.s32.totalorder %s23, 0
      %p70 = por %p68, %p69
      %p71 = scmp.ne.s32.totalorder %s57, %s58
      %p72 = scmp.eq.s32.totalorder %s24, 3
      %p73 = por %p71, %p72
      %p75 = scmp.ne.s32.totalorder %s58, %s74
      %p76 = scmp.eq.s32.totalorder %s24, 0
      %p77 = por %p75, %p76
      %p78 = scmp.le.s32.totalorder 1, %s18
      %p79 = scmp.lt.s32.totalorder %s18, 5
      %p80 = pnand %p78, %p79
      %p81 = pneg %p80
      // Predicated region
      $region9: #{tpu_custom_call.1} parent=5 // pred_check
        _
      $region10: #{tpu_custom_call.1} parent=5 // pred_check_branch
        %83 = sbr.rel (%p80) target = $region12
      $region11: #{tpu_custom_call.1} parent=5 // pred_region
        %s84 = ssub.s32 %s18, 1
      $region12: #{tpu_custom_call.1} parent=5 // pred_fallthru
        _
      %p85 = scmp.lt.s32.totalorder %s18, 4
      // Predicated region
      $region13: #{tpu_custom_call.1} parent=5 // pred_check
        %p86 = pneg %p85
      $region14: #{tpu_custom_call.1} parent=5 // pred_check_branch
        %88 = sbr.rel (%p86) target = $region16
      $region15: #{tpu_custom_call.1} parent=5 // pred_region
        // Predicated region
        $region17: #{tpu_custom_call.1} parent=15 // pred_check
          %p89 = pneg %p38
        $region18: #{tpu_custom_call.1} parent=15 // pred_check_branch
          %91 = sbr.rel (%p89) target = $region20
        $region19: #{tpu_custom_call.1} parent=15 // pred_region
          %s92 = sand.u32 %s28, 1
          %s93 = scalar_lea.sflag [#allocation5], %s92
          %s94 = sand.u32 %s28, 1
          %s95 = smul.addr %s94, 512
          %s96 = scalar_lea.vmem [#allocation4], %s95
          %s97 = smul.u32 16, %s18
          %s99 = ssub.s32 8192, 8192
          %100 = vsyncadd %s93, %s99
          %s101 = smul.addr %s97, 4
          %s102 = smul.addr %s101, 128
          %s103 = scalar_lea.hbm %s1, %s102
          %s104 = sshll.u32 %s96, 4
          %s105 = int_to_ptr.vmem [resolvable:$true] %s104
          %110 = dma.hbm_to_vmem [thread:$0]  %s103, 8192, %s105, %s93, 512, 512, 32
        $region20: #{tpu_custom_call.1} parent=15 // pred_fallthru
          _
      $region16: #{tpu_custom_call.1} parent=5 // pred_fallthru
        _
      %p111 = scmp.le.s32.totalorder 1, %s18
      %p112 = scmp.lt.s32.totalorder %s18, 5
      %p113 = pnand %p111, %p112
      %p114 = pneg %p113
      // Predicated region
      $region21: #{tpu_custom_call.1} parent=5 // pred_check
        _
      $region22: #{tpu_custom_call.1} parent=5 // pred_check_branch
        %116 = sbr.rel (%p113) target = $region24
      $region23: #{tpu_custom_call.1} parent=5 // pred_region
        %s117 = ssub.s32 %s18, 1
        %s118 = sand.u32 %s31, 1
        %s119 = scalar_lea.sflag [#allocation5], %s118
        %s120 = sand.u32 %s31, 1
        %s121 = smul.addr %s120, 512
        %s122 = scalar_lea.vmem [#allocation4], %s121
        // Predicated region
        $region25: #{tpu_custom_call.1} parent=23 // pred_check
          %p123 = pneg %p44
        $region26: #{tpu_custom_call.1} parent=23 // pred_check_branch
          %125 = sbr.rel (%p123) target = $region28
        $region27: #{tpu_custom_call.1} parent=23 // pred_region
          %126 = dma.done %s119, 8192
        $region28: #{tpu_custom_call.1} parent=23 // pred_fallthru
          _
        %s127 = sand.u32 %s31, 1
        %s128 = scalar_lea.sflag [#allocation5], %s127
        %s129 = sand.u32 %s31, 1
        %s130 = smul.addr %s129, 512
        %s131 = scalar_lea.vmem [#allocation4], %s130
        %p132 = pneg %p44
        %p133 = pneg %p41
        %p134 = pneg %p70
        %p135 = pneg %p67
        %s136 = sand.u32 %s57, 1
        %s137 = scalar_lea.sflag [#allocation6], %s136
        %s138 = sand.u32 %s57, 1
        %s139 = smul.addr %s138, 512
        %s140 = scalar_lea.vmem [#allocation7], %s139
        %s141 = smul.u32 16, %s23
        %s142 = smul.u32 16, %s23
        %v143 = vld [vmem:[%s122] sm:$0xff]
        %v144 = vld [vmem:[%s122 + $0x8] sm:$0xff]
        %v145 = vld [vmem:[%s122 + $0x10] sm:$0xff]
        %v146 = vld [vmem:[%s122 + $0x18] sm:$0xff]
        %v147 = vld [vmem:[%s122 + $0x20] sm:$0xff]
        %v148 = vld [vmem:[%s122 + $0x28] sm:$0xff]
        %v149 = vld [vmem:[%s122 + $0x30] sm:$0xff]
        %v150 = vld [vmem:[%s122 + $0x38] sm:$0xff]
        %v151 = vld [vmem:[%s122 + $0x40] sm:$0xff]
        %v152 = vld [vmem:[%s122 + $0x48] sm:$0xff]
        %v153 = vld [vmem:[%s122 + $0x50] sm:$0xff]
        %v154 = vld [vmem:[%s122 + $0x58] sm:$0xff]
        %v155 = vld [vmem:[%s122 + $0x60] sm:$0xff]
        %v156 = vld [vmem:[%s122 + $0x68] sm:$0xff]
        %v157 = vld [vmem:[%s122 + $0x70] sm:$0xff]
        %v158 = vld [vmem:[%s122 + $0x78] sm:$0xff]
        %v159 = vld [vmem:[%s122 + $0x80] sm:$0xff]
        %v160 = vld [vmem:[%s122 + $0x88] sm:$0xff]
        %v161 = vld [vmem:[%s122 + $0x90] sm:$0xff]
        %v162 = vld [vmem:[%s122 + $0x98] sm:$0xff]
        %v163 = vld [vmem:[%s122 + $0xa0] sm:$0xff]
        %v164 = vld [vmem:[%s122 + $0xa8] sm:$0xff]
        %v165 = vld [vmem:[%s122 + $0xb0] sm:$0xff]
        %v166 = vld [vmem:[%s122 + $0xb8] sm:$0xff]
        %v167 = vld [vmem:[%s122 + $0xc0] sm:$0xff]
        %v168 = vld [vmem:[%s122 + $0xc8] sm:$0xff]
        %v169 = vld [vmem:[%s122 + $0xd0] sm:$0xff]
        %v170 = vld [vmem:[%s122 + $0xd8] sm:$0xff]
        %v171 = vld [vmem:[%s122 + $0xe0] sm:$0xff]
        %v172 = vld [vmem:[%s122 + $0xe8] sm:$0xff]
        %v173 = vld [vmem:[%s122 + $0xf0] sm:$0xff]
        %v174 = vld [vmem:[%s122 + $0xf8] sm:$0xff]
        %v175 = vld [vmem:[%s122 + $0x100] sm:$0xff]
        %v176 = vld [vmem:[%s122 + $0x108] sm:$0xff]
        %v177 = vld [vmem:[%s122 + $0x110] sm:$0xff]
        %v178 = vld [vmem:[%s122 + $0x118] sm:$0xff]
        %v179 = vld [vmem:[%s122 + $0x120] sm:$0xff]
        %v180 = vld [vmem:[%s122 + $0x128] sm:$0xff]
        %v181 = vld [vmem:[%s122 + $0x130] sm:$0xff]
        %v182 = vld [vmem:[%s122 + $0x138] sm:$0xff]
        %v183 = vld [vmem:[%s122 + $0x140] sm:$0xff]
        %v184 = vld [vmem:[%s122 + $0x148] sm:$0xff]
        %v185 = vld [vmem:[%s122 + $0x150] sm:$0xff]
        %v186 = vld [vmem:[%s122 + $0x158] sm:$0xff]
        %v187 = vld [vmem:[%s122 + $0x160] sm:$0xff]
        %v188 = vld [vmem:[%s122 + $0x168] sm:$0xff]
        %v189 = vld [vmem:[%s122 + $0x170] sm:$0xff]
        %v190 = vld [vmem:[%s122 + $0x178] sm:$0xff]
        %v191 = vld [vmem:[%s122 + $0x180] sm:$0xff]
        %v192 = vld [vmem:[%s122 + $0x188] sm:$0xff]
        %v193 = vld [vmem:[%s122 + $0x190] sm:$0xff]
        %v194 = vld [vmem:[%s122 + $0x198] sm:$0xff]
        %v195 = vld [vmem:[%s122 + $0x1a0] sm:$0xff]
        %v196 = vld [vmem:[%s122 + $0x1a8] sm:$0xff]
        %v197 = vld [vmem:[%s122 + $0x1b0] sm:$0xff]
        %v198 = vld [vmem:[%s122 + $0x1b8] sm:$0xff]
        %v199 = vld [vmem:[%s122 + $0x1c0] sm:$0xff]
        %v200 = vld [vmem:[%s122 + $0x1c8] sm:$0xff]
        %v201 = vld [vmem:[%s122 + $0x1d0] sm:$0xff]
        %v202 = vld [vmem:[%s122 + $0x1d8] sm:$0xff]
        %v203 = vld [vmem:[%s122 + $0x1e0] sm:$0xff]
        %v204 = vld [vmem:[%s122 + $0x1e8] sm:$0xff]
        %v205 = vld [vmem:[%s122 + $0x1f0] sm:$0xff]
        %v206 = vld [vmem:[%s122 + $0x1f8] sm:$0xff]
        %s207 = sld [smem:[#allocation3 + $0x3]]
        %v208 = vstv %s207
        %v209 = vmul.f32 %v208, %v143
        %v210 = vmul.f32 %v208, %v144
        %v211 = vmul.f32 %v208, %v145
        %v212 = vmul.f32 %v208, %v146
        %v213 = vmul.f32 %v208, %v147
        %v214 = vmul.f32 %v208, %v148
        %v215 = vmul.f32 %v208, %v149
        %v216 = vmul.f32 %v208, %v150
        %v217 = vmul.f32 %v208, %v151
        %v218 = vmul.f32 %v208, %v152
        %v219 = vmul.f32 %v208, %v153
        %v220 = vmul.f32 %v208, %v154
        %v221 = vmul.f32 %v208, %v155
        %v222 = vmul.f32 %v208, %v156
        %v223 = vmul.f32 %v208, %v157
        %v224 = vmul.f32 %v208, %v158
        %v225 = vmul.f32 %v208, %v159
        %v226 = vmul.f32 %v208, %v160
        %v227 = vmul.f32 %v208, %v161
        %v228 = vmul.f32 %v208, %v162
        %v229 = vmul.f32 %v208, %v163
        %v230 = vmul.f32 %v208, %v164
        %v231 = vmul.f32 %v208, %v165
        %v232 = vmul.f32 %v208, %v166
        %v233 = vmul.f32 %v208, %v167
        %v234 = vmul.f32 %v208, %v168
        %v235 = vmul.f32 %v208, %v169
        %v236 = vmul.f32 %v208, %v170
        %v237 = vmul.f32 %v208, %v171
        %v238 = vmul.f32 %v208, %v172
        %v239 = vmul.f32 %v208, %v173
        %v240 = vmul.f32 %v208, %v174
        %v241 = vmul.f32 %v208, %v175
        %v242 = vmul.f32 %v208, %v176
        %v243 = vmul.f32 %v208, %v177
        %v244 = vmul.f32 %v208, %v178
        %v245 = vmul.f32 %v208, %v179
        %v246 = vmul.f32 %v208, %v180
        %v247 = vmul.f32 %v208, %v181
        %v248 = vmul.f32 %v208, %v182
        %v249 = vmul.f32 %v208, %v183
        %v250 = vmul.f32 %v208, %v184
        %v251 = vmul.f32 %v208, %v185
        %v252 = vmul.f32 %v208, %v186
        %v253 = vmul.f32 %v208, %v187
        %v254 = vmul.f32 %v208, %v188
        %v255 = vmul.f32 %v208, %v189
        %v256 = vmul.f32 %v208, %v190
        %v257 = vmul.f32 %v208, %v191
        %v258 = vmul.f32 %v208, %v192
        %v259 = vmul.f32 %v208, %v193
        %v260 = vmul.f32 %v208, %v194
        %v261 = vmul.f32 %v208, %v195
        %v262 = vmul.f32 %v208, %v196
        %v263 = vmul.f32 %v208, %v197
        %v264 = vmul.f32 %v208, %v198
        %v265 = vmul.f32 %v208, %v199
        %v266 = vmul.f32 %v208, %v200
        %v267 = vmul.f32 %v208, %v201
        %v268 = vmul.f32 %v208, %v202
        %v269 = vmul.f32 %v208, %v203
        %v270 = vmul.f32 %v208, %v204
        %v271 = vmul.f32 %v208, %v205
        %v272 = vmul.f32 %v208, %v206
        %s273 = sld [smem:[#allocation3 + $0x2]]
        %v274 = vstv %s273
        %v275 = vadd.f32 %v209, %v274
        %v276 = vadd.f32 %v210, %v274
        %v277 = vadd.f32 %v211, %v274
        %v278 = vadd.f32 %v212, %v274
        %v279 = vadd.f32 %v213, %v274
        %v280 = vadd.f32 %v214, %v274
        %v281 = vadd.f32 %v215, %v274
        %v282 = vadd.f32 %v216, %v274
        %v283 = vadd.f32 %v217, %v274
        %v284 = vadd.f32 %v218, %v274
        %v285 = vadd.f32 %v219, %v274
        %v286 = vadd.f32 %v220, %v274
        %v287 = vadd.f32 %v221, %v274
        %v288 = vadd.f32 %v222, %v274
        %v289 = vadd.f32 %v223, %v274
        %v290 = vadd.f32 %v224, %v274
        %v291 = vadd.f32 %v225, %v274
        %v292 = vadd.f32 %v226, %v274
        %v293 = vadd.f32 %v227, %v274
        %v294 = vadd.f32 %v228, %v274
        %v295 = vadd.f32 %v229, %v274
        %v296 = vadd.f32 %v230, %v274
        %v297 = vadd.f32 %v231, %v274
        %v298 = vadd.f32 %v232, %v274
        %v299 = vadd.f32 %v233, %v274
        %v300 = vadd.f32 %v234, %v274
        %v301 = vadd.f32 %v235, %v274
        %v302 = vadd.f32 %v236, %v274
        %v303 = vadd.f32 %v237, %v274
        %v304 = vadd.f32 %v238, %v274
        %v305 = vadd.f32 %v239, %v274
        %v306 = vadd.f32 %v240, %v274
        %v307 = vadd.f32 %v241, %v274
        %v308 = vadd.f32 %v242, %v274
        %v309 = vadd.f32 %v243, %v274
        %v310 = vadd.f32 %v244, %v274
        %v311 = vadd.f32 %v245, %v274
        %v312 = vadd.f32 %v246, %v274
        %v313 = vadd.f32 %v247, %v274
        %v314 = vadd.f32 %v248, %v274
        %v315 = vadd.f32 %v249, %v274
        %v316 = vadd.f32 %v250, %v274
        %v317 = vadd.f32 %v251, %v274
        %v318 = vadd.f32 %v252, %v274
        %v319 = vadd.f32 %v253, %v274
        %v320 = vadd.f32 %v254, %v274
        %v321 = vadd.f32 %v255, %v274
        %v322 = vadd.f32 %v256, %v274
        %v323 = vadd.f32 %v257, %v274
        %v324 = vadd.f32 %v258, %v274
        %v325 = vadd.f32 %v259, %v274
        %v326 = vadd.f32 %v260, %v274
        %v327 = vadd.f32 %v261, %v274
        %v328 = vadd.f32 %v262, %v274
        %v329 = vadd.f32 %v263, %v274
        %v330 = vadd.f32 %v264, %v274
        %v331 = vadd.f32 %v265, %v274
        %v332 = vadd.f32 %v266, %v274
        %v333 = vadd.f32 %v267, %v274
        %v334 = vadd.f32 %v268, %v274
        %v335 = vadd.f32 %v269, %v274
        %v336 = vadd.f32 %v270, %v274
        %v337 = vadd.f32 %v271, %v274
        %v338 = vadd.f32 %v272, %v274
        %v339 = vmul.f32 %v275, %v143
        %v340 = vmul.f32 %v276, %v144
        %v341 = vmul.f32 %v277, %v145
        %v342 = vmul.f32 %v278, %v146
        %v343 = vmul.f32 %v279, %v147
        %v344 = vmul.f32 %v280, %v148
        %v345 = vmul.f32 %v281, %v149
        %v346 = vmul.f32 %v282, %v150
        %v347 = vmul.f32 %v283, %v151
        %v348 = vmul.f32 %v284, %v152
        %v349 = vmul.f32 %v285, %v153
        %v350 = vmul.f32 %v286, %v154
        %v351 = vmul.f32 %v287, %v155
        %v352 = vmul.f32 %v288, %v156
        %v353 = vmul.f32 %v289, %v157
        %v354 = vmul.f32 %v290, %v158
        %v355 = vmul.f32 %v291, %v159
        %v356 = vmul.f32 %v292, %v160
        %v357 = vmul.f32 %v293, %v161
        %v358 = vmul.f32 %v294, %v162
        %v359 = vmul.f32 %v295, %v163
        %v360 = vmul.f32 %v296, %v164
        %v361 = vmul.f32 %v297, %v165
        %v362 = vmul.f32 %v298, %v166
        %v363 = vmul.f32 %v299, %v167
        %v364 = vmul.f32 %v300, %v168
        %v365 = vmul.f32 %v301, %v169
        %v366 = vmul.f32 %v302, %v170
        %v367 = vmul.f32 %v303, %v171
        %v368 = vmul.f32 %v304, %v172
        %v369 = vmul.f32 %v305, %v173
        %v370 = vmul.f32 %v306, %v174
        %v371 = vmul.f32 %v307, %v175
        %v372 = vmul.f32 %v308, %v176
        %v373 = vmul.f32 %v309, %v177
        %v374 = vmul.f32 %v310, %v178
        %v375 = vmul.f32 %v311, %v179
        %v376 = vmul.f32 %v312, %v180
        %v377 = vmul.f32 %v313, %v181
        %v378 = vmul.f32 %v314, %v182
        %v379 = vmul.f32 %v315, %v183
        %v380 = vmul.f32 %v316, %v184
        %v381 = vmul.f32 %v317, %v185
        %v382 = vmul.f32 %v318, %v186
        %v383 = vmul.f32 %v319, %v187
        %v384 = vmul.f32 %v320, %v188
        %v385 = vmul.f32 %v321, %v189
        %v386 = vmul.f32 %v322, %v190
        %v387 = vmul.f32 %v323, %v191
        %v388 = vmul.f32 %v324, %v192
        %v389 = vmul.f32 %v325, %v193
        %v390 = vmul.f32 %v326, %v194
        %v391 = vmul.f32 %v327, %v195
        %v392 = vmul.f32 %v328, %v196
        %v393 = vmul.f32 %v329, %v197
        %v394 = vmul.f32 %v330, %v198
        %v395 = vmul.f32 %v331, %v199
        %v396 = vmul.f32 %v332, %v200
        %v397 = vmul.f32 %v333, %v201
        %v398 = vmul.f32 %v334, %v202
        %v399 = vmul.f32 %v335, %v203
        %v400 = vmul.f32 %v336, %v204
        %v401 = vmul.f32 %v337, %v205
        %v402 = vmul.f32 %v338, %v206
        %s403 = sld [smem:[#allocation3 + $0x1]]
        %v404 = vstv %s403
        %v405 = vadd.f32 %v339, %v404
        %v406 = vadd.f32 %v340, %v404
        %v407 = vadd.f32 %v341, %v404
        %v408 = vadd.f32 %v342, %v404
        %v409 = vadd.f32 %v343, %v404
        %v410 = vadd.f32 %v344, %v404
        %v411 = vadd.f32 %v345, %v404
        %v412 = vadd.f32 %v346, %v404
        %v413 = vadd.f32 %v347, %v404
        %v414 = vadd.f32 %v348, %v404
        %v415 = vadd.f32 %v349, %v404
        %v416 = vadd.f32 %v350, %v404
        %v417 = vadd.f32 %v351, %v404
        %v418 = vadd.f32 %v352, %v404
        %v419 = vadd.f32 %v353, %v404
        %v420 = vadd.f32 %v354, %v404
        %v421 = vadd.f32 %v355, %v404
        %v422 = vadd.f32 %v356, %v404
        %v423 = vadd.f32 %v357, %v404
        %v424 = vadd.f32 %v358, %v404
        %v425 = vadd.f32 %v359, %v404
        %v426 = vadd.f32 %v360, %v404
        %v427 = vadd.f32 %v361, %v404
        %v428 = vadd.f32 %v362, %v404
        %v429 = vadd.f32 %v363, %v404
        %v430 = vadd.f32 %v364, %v404
        %v431 = vadd.f32 %v365, %v404
        %v432 = vadd.f32 %v366, %v404
        %v433 = vadd.f32 %v367, %v404
        %v434 = vadd.f32 %v368, %v404
        %v435 = vadd.f32 %v369, %v404
        %v436 = vadd.f32 %v370, %v404
        %v437 = vadd.f32 %v371, %v404
        %v438 = vadd.f32 %v372, %v404
        %v439 = vadd.f32 %v373, %v404
        %v440 = vadd.f32 %v374, %v404
        %v441 = vadd.f32 %v375, %v404
        %v442 = vadd.f32 %v376, %v404
        %v443 = vadd.f32 %v377, %v404
        %v444 = vadd.f32 %v378, %v404
        %v445 = vadd.f32 %v379, %v404
        %v446 = vadd.f32 %v380, %v404
        %v447 = vadd.f32 %v381, %v404
        %v448 = vadd.f32 %v382, %v404
        %v449 = vadd.f32 %v383, %v404
        %v450 = vadd.f32 %v384, %v404
        %v451 = vadd.f32 %v385, %v404
        %v452 = vadd.f32 %v386, %v404
        %v453 = vadd.f32 %v387, %v404
        %v454 = vadd.f32 %v388, %v404
        %v455 = vadd.f32 %v389, %v404
        %v456 = vadd.f32 %v390, %v404
        %v457 = vadd.f32 %v391, %v404
        %v458 = vadd.f32 %v392, %v404
        %v459 = vadd.f32 %v393, %v404
        %v460 = vadd.f32 %v394, %v404
        %v461 = vadd.f32 %v395, %v404
        %v462 = vadd.f32 %v396, %v404
        %v463 = vadd.f32 %v397, %v404
        %v464 = vadd.f32 %v398, %v404
        %v465 = vadd.f32 %v399, %v404
        %v466 = vadd.f32 %v400, %v404
        %v467 = vadd.f32 %v401, %v404
        %v468 = vadd.f32 %v402, %v404
        %v469 = vmul.f32 %v405, %v143
        %v470 = vmul.f32 %v406, %v144
        %v471 = vmul.f32 %v407, %v145
        %v472 = vmul.f32 %v408, %v146
        %v473 = vmul.f32 %v409, %v147
        %v474 = vmul.f32 %v410, %v148
        %v475 = vmul.f32 %v411, %v149
        %v476 = vmul.f32 %v412, %v150
        %v477 = vmul.f32 %v413, %v151
        %v478 = vmul.f32 %v414, %v152
        %v479 = vmul.f32 %v415, %v153
        %v480 = vmul.f32 %v416, %v154
        %v481 = vmul.f32 %v417, %v155
        %v482 = vmul.f32 %v418, %v156
        %v483 = vmul.f32 %v419, %v157
        %v484 = vmul.f32 %v420, %v158
        %v485 = vmul.f32 %v421, %v159
        %v486 = vmul.f32 %v422, %v160
        %v487 = vmul.f32 %v423, %v161
        %v488 = vmul.f32 %v424, %v162
        %v489 = vmul.f32 %v425, %v163
        %v490 = vmul.f32 %v426, %v164
        %v491 = vmul.f32 %v427, %v165
        %v492 = vmul.f32 %v428, %v166
        %v493 = vmul.f32 %v429, %v167
        %v494 = vmul.f32 %v430, %v168
        %v495 = vmul.f32 %v431, %v169
        %v496 = vmul.f32 %v432, %v170
        %v497 = vmul.f32 %v433, %v171
        %v498 = vmul.f32 %v434, %v172
        %v499 = vmul.f32 %v435, %v173
        %v500 = vmul.f32 %v436, %v174
        %v501 = vmul.f32 %v437, %v175
        %v502 = vmul.f32 %v438, %v176
        %v503 = vmul.f32 %v439, %v177
        %v504 = vmul.f32 %v440, %v178
        %v505 = vmul.f32 %v441, %v179
        %v506 = vmul.f32 %v442, %v180
        %v507 = vmul.f32 %v443, %v181
        %v508 = vmul.f32 %v444, %v182
        %v509 = vmul.f32 %v445, %v183
        %v510 = vmul.f32 %v446, %v184
        %v511 = vmul.f32 %v447, %v185
        %v512 = vmul.f32 %v448, %v186
        %v513 = vmul.f32 %v449, %v187
        %v514 = vmul.f32 %v450, %v188
        %v515 = vmul.f32 %v451, %v189
        %v516 = vmul.f32 %v452, %v190
        %v517 = vmul.f32 %v453, %v191
        %v518 = vmul.f32 %v454, %v192
        %v519 = vmul.f32 %v455, %v193
        %v520 = vmul.f32 %v456, %v194
        %v521 = vmul.f32 %v457, %v195
        %v522 = vmul.f32 %v458, %v196
        %v523 = vmul.f32 %v459, %v197
        %v524 = vmul.f32 %v460, %v198
        %v525 = vmul.f32 %v461, %v199
        %v526 = vmul.f32 %v462, %v200
        %v527 = vmul.f32 %v463, %v201
        %v528 = vmul.f32 %v464, %v202
        %v529 = vmul.f32 %v465, %v203
        %v530 = vmul.f32 %v466, %v204
        %v531 = vmul.f32 %v467, %v205
        %v532 = vmul.f32 %v468, %v206
        %s533 = sld [smem:[#allocation3]]
        %v534 = vstv %s533
        %v535 = vadd.f32 %v469, %v534
        %v536 = vadd.f32 %v470, %v534
        %v537 = vadd.f32 %v471, %v534
        %v538 = vadd.f32 %v472, %v534
        %v539 = vadd.f32 %v473, %v534
        %v540 = vadd.f32 %v474, %v534
        %v541 = vadd.f32 %v475, %v534
        %v542 = vadd.f32 %v476, %v534
        %v543 = vadd.f32 %v477, %v534
        %v544 = vadd.f32 %v478, %v534
        %v545 = vadd.f32 %v479, %v534
        %v546 = vadd.f32 %v480, %v534
        %v547 = vadd.f32 %v481, %v534
        %v548 = vadd.f32 %v482, %v534
        %v549 = vadd.f32 %v483, %v534
        %v550 = vadd.f32 %v484, %v534
        %v551 = vadd.f32 %v485, %v534
        %v552 = vadd.f32 %v486, %v534
        %v553 = vadd.f32 %v487, %v534
        %v554 = vadd.f32 %v488, %v534
        %v555 = vadd.f32 %v489, %v534
        %v556 = vadd.f32 %v490, %v534
        %v557 = vadd.f32 %v491, %v534
        %v558 = vadd.f32 %v492, %v534
        %v559 = vadd.f32 %v493, %v534
        %v560 = vadd.f32 %v494, %v534
        %v561 = vadd.f32 %v495, %v534
        %v562 = vadd.f32 %v496, %v534
        %v563 = vadd.f32 %v497, %v534
        %v564 = vadd.f32 %v498, %v534
        %v565 = vadd.f32 %v499, %v534
        %v566 = vadd.f32 %v500, %v534
        %v567 = vadd.f32 %v501, %v534
        %v568 = vadd.f32 %v502, %v534
        %v569 = vadd.f32 %v503, %v534
        %v570 = vadd.f32 %v504, %v534
        %v571 = vadd.f32 %v505, %v534
        %v572 = vadd.f32 %v506, %v534
        %v573 = vadd.f32 %v507, %v534
        %v574 = vadd.f32 %v508, %v534
        %v575 = vadd.f32 %v509, %v534
        %v576 = vadd.f32 %v510, %v534
        %v577 = vadd.f32 %v511, %v534
        %v578 = vadd.f32 %v512, %v534
        %v579 = vadd.f32 %v513, %v534
        %v580 = vadd.f32 %v514, %v534
        %v581 = vadd.f32 %v515, %v534
        %v582 = vadd.f32 %v516, %v534
        %v583 = vadd.f32 %v517, %v534
        %v584 = vadd.f32 %v518, %v534
        %v585 = vadd.f32 %v519, %v534
        %v586 = vadd.f32 %v520, %v534
        %v587 = vadd.f32 %v521, %v534
        %v588 = vadd.f32 %v522, %v534
        %v589 = vadd.f32 %v523, %v534
        %v590 = vadd.f32 %v524, %v534
        %v591 = vadd.f32 %v525, %v534
        %v592 = vadd.f32 %v526, %v534
        %v593 = vadd.f32 %v527, %v534
        %v594 = vadd.f32 %v528, %v534
        %v595 = vadd.f32 %v529, %v534
        %v596 = vadd.f32 %v530, %v534
        %v597 = vadd.f32 %v531, %v534
        %v598 = vadd.f32 %v532, %v534
        %599 = vst [vmem:[%s140] sm:$0xff] %v535
        %600 = vst [vmem:[%s140 + $0x8] sm:$0xff] %v536
        %601 = vst [vmem:[%s140 + $0x10] sm:$0xff] %v537
        %602 = vst [vmem:[%s140 + $0x18] sm:$0xff] %v538
        %603 = vst [vmem:[%s140 + $0x20] sm:$0xff] %v539
        %604 = vst [vmem:[%s140 + $0x28] sm:$0xff] %v540
        %605 = vst [vmem:[%s140 + $0x30] sm:$0xff] %v541
        %606 = vst [vmem:[%s140 + $0x38] sm:$0xff] %v542
        %607 = vst [vmem:[%s140 + $0x40] sm:$0xff] %v543
        %608 = vst [vmem:[%s140 + $0x48] sm:$0xff] %v544
        %609 = vst [vmem:[%s140 + $0x50] sm:$0xff] %v545
        %610 = vst [vmem:[%s140 + $0x58] sm:$0xff] %v546
        %611 = vst [vmem:[%s140 + $0x60] sm:$0xff] %v547
        %612 = vst [vmem:[%s140 + $0x68] sm:$0xff] %v548
        %613 = vst [vmem:[%s140 + $0x70] sm:$0xff] %v549
        %614 = vst [vmem:[%s140 + $0x78] sm:$0xff] %v550
        %615 = vst [vmem:[%s140 + $0x80] sm:$0xff] %v551
        %616 = vst [vmem:[%s140 + $0x88] sm:$0xff] %v552
        %617 = vst [vmem:[%s140 + $0x90] sm:$0xff] %v553
        %618 = vst [vmem:[%s140 + $0x98] sm:$0xff] %v554
        %619 = vst [vmem:[%s140 + $0xa0] sm:$0xff] %v555
        %620 = vst [vmem:[%s140 + $0xa8] sm:$0xff] %v556
        %621 = vst [vmem:[%s140 + $0xb0] sm:$0xff] %v557
        %622 = vst [vmem:[%s140 + $0xb8] sm:$0xff] %v558
        %623 = vst [vmem:[%s140 + $0xc0] sm:$0xff] %v559
        %624 = vst [vmem:[%s140 + $0xc8] sm:$0xff] %v560
        %625 = vst [vmem:[%s140 + $0xd0] sm:$0xff] %v561
        %626 = vst [vmem:[%s140 + $0xd8] sm:$0xff] %v562
        %627 = vst [vmem:[%s140 + $0xe0] sm:$0xff] %v563
        %628 = vst [vmem:[%s140 + $0xe8] sm:$0xff] %v564
        %629 = vst [vmem:[%s140 + $0xf0] sm:$0xff] %v565
        %630 = vst [vmem:[%s140 + $0xf8] sm:$0xff] %v566
        %631 = vst [vmem:[%s140 + $0x100] sm:$0xff] %v567
        %632 = vst [vmem:[%s140 + $0x108] sm:$0xff] %v568
        %633 = vst [vmem:[%s140 + $0x110] sm:$0xff] %v569
        %634 = vst [vmem:[%s140 + $0x118] sm:$0xff] %v570
        %635 = vst [vmem:[%s140 + $0x120] sm:$0xff] %v571
        %636 = vst [vmem:[%s140 + $0x128] sm:$0xff] %v572
        %637 = vst [vmem:[%s140 + $0x130] sm:$0xff] %v573
        %638 = vst [vmem:[%s140 + $0x138] sm:$0xff] %v574
        %639 = vst [vmem:[%s140 + $0x140] sm:$0xff] %v575
        %640 = vst [vmem:[%s140 + $0x148] sm:$0xff] %v576
        %641 = vst [vmem:[%s140 + $0x150] sm:$0xff] %v577
        %642 = vst [vmem:[%s140 + $0x158] sm:$0xff] %v578
        %643 = vst [vmem:[%s140 + $0x160] sm:$0xff] %v579
        %644 = vst [vmem:[%s140 + $0x168] sm:$0xff] %v580
        %645 = vst [vmem:[%s140 + $0x170] sm:$0xff] %v581
        %646 = vst [vmem:[%s140 + $0x178] sm:$0xff] %v582
        %647 = vst [vmem:[%s140 + $0x180] sm:$0xff] %v583
        %648 = vst [vmem:[%s140 + $0x188] sm:$0xff] %v584
        %649 = vst [vmem:[%s140 + $0x190] sm:$0xff] %v585
        %650 = vst [vmem:[%s140 + $0x198] sm:$0xff] %v586
        %651 = vst [vmem:[%s140 + $0x1a0] sm:$0xff] %v587
        %652 = vst [vmem:[%s140 + $0x1a8] sm:$0xff] %v588
        %653 = vst [vmem:[%s140 + $0x1b0] sm:$0xff] %v589
        %654 = vst [vmem:[%s140 + $0x1b8] sm:$0xff] %v590
        %655 = vst [vmem:[%s140 + $0x1c0] sm:$0xff] %v591
        %656 = vst [vmem:[%s140 + $0x1c8] sm:$0xff] %v592
        %657 = vst [vmem:[%s140 + $0x1d0] sm:$0xff] %v593
        %658 = vst [vmem:[%s140 + $0x1d8] sm:$0xff] %v594
        %659 = vst [vmem:[%s140 + $0x1e0] sm:$0xff] %v595
        %660 = vst [vmem:[%s140 + $0x1e8] sm:$0xff] %v596
        %661 = vst [vmem:[%s140 + $0x1f0] sm:$0xff] %v597
        %662 = vst [vmem:[%s140 + $0x1f8] sm:$0xff] %v598
        %s663 = sand.u32 %s57, 1
        %s664 = scalar_lea.sflag [#allocation6], %s663
        %s665 = sand.u32 %s57, 1
        %s666 = smul.addr %s665, 512
        %s667 = scalar_lea.vmem [#allocation7], %s666
        // Predicated region
        $region29: #{tpu_custom_call.1} parent=23 // pred_check
          %p668 = pneg %p67
        $region30: #{tpu_custom_call.1} parent=23 // pred_check_branch
          %670 = sbr.rel (%p668) target = $region32
        $region31: #{tpu_custom_call.1} parent=23 // pred_region
          %s671 = smul.u32 16, %s23
          %s673 = ssub.s32 8192, 8192
          %674 = vsyncadd %s664, %s673
          %s675 = smul.addr %s671, 4
          %s676 = smul.addr %s675, 128
          %s677 = scalar_lea.hbm %s2, %s676
          %s678 = sshll.u32 %s667, 4
          %s679 = int_to_ptr.vmem [resolvable:$true] %s678
          %684 = dma.vmem_to_hbm [thread:$0]  %s679, 8192, %s677, %s664, 512, 512, 32
        $region32: #{tpu_custom_call.1} parent=23 // pred_fallthru
          _
      $region24: #{tpu_custom_call.1} parent=5 // pred_fallthru
        _
      %p685 = scmp.le.s32.totalorder 2, %s18
      // Predicated region
      $region33: #{tpu_custom_call.1} parent=5 // pred_check
        %p686 = pneg %p685
      $region34: #{tpu_custom_call.1} parent=5 // pred_check_branch
        %688 = sbr.rel (%p686) target = $region36
      $region35: #{tpu_custom_call.1} parent=5 // pred_region
        %s689 = ssub.s32 %s18, 2
        // Predicated region
        $region37: #{tpu_custom_call.1} parent=35 // pred_check
          %p690 = pneg %p73
        $region38: #{tpu_custom_call.1} parent=35 // pred_check_branch
          %692 = sbr.rel (%p690) target = $region40
        $region39: #{tpu_custom_call.1} parent=35 // pred_region
          %s693 = sand.u32 %s58, 1
          %s694 = scalar_lea.sflag [#allocation6], %s693
          %s695 = sand.u32 %s58, 1
          %s696 = smul.addr %s695, 512
          %s697 = scalar_lea.vmem [#allocation7], %s696
          %698 = dma.done %s694, 8192
        $region40: #{tpu_custom_call.1} parent=35 // pred_fallthru
          _
      $region36: #{tpu_custom_call.1} parent=5 // pred_fallthru
        _
    $region6: #{tpu_custom_call.1} parent=1 // loop_footer
      %s22 = sadd.s32 1, %s18
    $region7: #{tpu_custom_call.1} parent=1 // loop_footer_branch
      %17 = sbr.rel target = $region3
    $region8: #{tpu_custom_call.1} parent=1 // loop_exit
      _
    %699 = vsyncpa [#allocation5], 1
    %s700 = scalar_lea.sflag [#allocation5], 1
    %701 = vsyncpa %s700, 1
    %702 = vsyncpa [#allocation6], 1
    %s703 = scalar_lea.sflag [#allocation6], 1
    %704 = vsyncpa %s703, 1

</llo_original>
